<compile_context>
chip_gen: v6e
topology: v6e:2x2x1
jax: 0.10.0
libtpu: 0.0.40
codegen_flags: <defaults>
</compile_context>

<pallas_src>
import functools

import jax
import jax.numpy as jnp
from jax.experimental import pallas as pl
from jax.experimental.pallas import tpu as pltpu


# ----------------------------- parameter slab ------------------------------ #
def _round8(x):
    return ((x + 7) // 8) * 8


def _param_layout(c, h):
    """8-row-aligned offsets of each parameter block inside the packed slab."""
    off_w1 = 0
    off_b1 = off_w1 + _round8(c)
    off_w2 = off_b1 + 8
    off_b2 = off_w2 + _round8(h)
    off_wfc = off_b2 + 8
    off_bfc = off_wfc + _round8(h)
    rows = off_bfc + 8
    return {"w1": off_w1, "b1": off_b1, "w2": off_w2, "b2": off_b2,
            "wfc": off_wfc, "bfc": off_bfc, "rows": rows}


def pack_params(params, c, h):
    """Pack all parameters into one [rows, h] f32 slab.

    Call ONCE when parameters are loaded (outside the jitted per-call path).
    The slab MUST stay zero-initialized so that the lane padding of wfc/bfc
    contributes exactly zero to logits columns >= 2.
    """
    lay = _param_layout(c, h)
    slab = jnp.zeros((lay["rows"], h), jnp.float32)

    def put(s, off, a):
        a = jnp.asarray(a, jnp.float32)
        if a.ndim == 1:                  # accept 1-D PyTorch-style biases
            a = a.reshape(1, -1)
        r, cc = a.shape
        return s.at[off:off + r, 0:cc].set(a)

    slab = put(slab, lay["w1"], params["w1"])
    slab = put(slab, lay["b1"], params["b1"])
    slab = put(slab, lay["w2"], params["w2"])
    slab = put(slab, lay["b2"], params["b2"])
    slab = put(slab, lay["wfc"], params["wfc"])
    slab = put(slab, lay["bfc"], params["bfc"])
    return slab


def pack_graph(a_hat, x):
    """Lane-concatenate a_hat [N,N] and x [N,C] -> [N, N+C] (one DMA per graph).

    Call once per graph (outside the jitted per-call path) if a_hat/x are reused.
    """
    return jnp.concatenate(
        [jnp.asarray(a_hat, jnp.float32), jnp.asarray(x, jnp.float32)], axis=1)


# ----------------------------- Pallas kernel ------------------------------- #
def gnn_kernel(gi_ref, gd_ref, p_ref, out_ref, logp_ref, *, n, c, h, g):
    b = pl.program_id(0)
    lay = _param_layout(c, h)

    # ---- unpack fused per-graph slab (static lane slices) ----
    a = gd_ref[:, 0:n]                                  # [N, N] normalized adjacency
    x = gd_ref[:, n:n + c]                              # [N, C] node features

    # ---- unpack parameter slab (static, 8-row-aligned sublane slices) ----
    w1 = p_ref[pl.ds(lay["w1"], c), :]                  # [C, H]
    b1 = p_ref[pl.ds(lay["b1"], 1), :]                  # [1, H]
    w2 = p_ref[pl.ds(lay["w2"], h), :]                  # [H, H]
    b2 = p_ref[pl.ds(lay["b2"], 1), :]                  # [1, H]
    wfc = p_ref[pl.ds(lay["wfc"], h), :]                # [H, H] (cols >= 2 are zero)
    bfc = p_ref[pl.ds(lay["bfc"], 1), :]                # [1, H] (cols >= 2 are zero)

    # ---- GCNConv 1: A_hat @ (X @ W1) + b1, ReLU ----
    hid = jnp.dot(x, w1, preferred_element_type=jnp.float32)            # [N, H]
    hid = jnp.maximum(jnp.dot(a, hid, preferred_element_type=jnp.float32) + b1, 0.0)
    # (F.dropout with training=False -> identity)

    # ---- GCNConv 2: A_hat @ (H @ W2) + b2, ReLU ----
    hid2 = jnp.dot(hid, w2, preferred_element_type=jnp.float32)         # [N, H]
    hid2 = jnp.maximum(jnp.dot(a, hid2, preferred_element_type=jnp.float32) + b2, 0.0)

    # ---- fc + 2-class log_softmax on ALL N rows (same MXU cost as G rows) ----
    logits = jnp.dot(hid2, wfc, preferred_element_type=jnp.float32) + bfc  # [N, H]
    l0 = logits[:, 0:1]
    l1 = logits[:, 1:2]
    m = jnp.maximum(l0, l1)
    lse = m + jnp.log(jnp.exp(l0 - m) + jnp.exp(l1 - m))
    logp_ref[...] = logits[:, 0:2] - lse                                 # [N, 2]

    # ---- gather game-node rows (clamped SMEM indices + dynamic sublane slices) ----
    for gg in range(g):                                  # g is small & static
        idx = gi_ref[b * g + gg]
        idx = jnp.minimum(jnp.maximum(idx, 0), n - 1)    # no OOB check on TPU VMEM
        out_ref[pl.ds(gg, 1), :] = logp_ref[pl.ds(idx, 1), :]


# ------------------------------ JAX wrapper -------------------------------- #
@jax.jit
def simple_hockey_gnn(param_slab, graph_data, game_indices):
    """Batched forward.

    param_slab:  [rows, H]   from pack_params (built once)
    graph_data:  [B, N, N+C] from pack_graph (built once per graph)
    game_indices:[B, G] int  game-node indices per graph
    returns:     [B, G, 2]   log-probabilities
    """
    b_graphs, n, w = graph_data.shape
    rows, h = param_slab.shape
    c = w - n
    g = game_indices.shape[-1]
    gi_flat = game_indices.reshape(-1).astype(jnp.int32)   # tiny [B*G] i32

    kernel = functools.partial(gnn_kernel, n=n, c=c, h=h, g=g)

    return pl.pallas_call(
        kernel,
        out_shape=jax.ShapeDtypeStruct((b_graphs, g, 2), jnp.float32),
        grid=(b_graphs,),
        in_specs=[
            pl.BlockSpec(memory_space=pltpu.MemorySpace.SMEM),    # game indices
            pl.BlockSpec((None, n, w), lambda b: (b, 0, 0)),      # per-graph a_hat|x
            pl.BlockSpec((rows, h), lambda b: (0, 0)),            # shared param slab
        ],
        out_specs=pl.BlockSpec((None, g, 2), lambda b: (b, 0, 0)),
        scratch_shapes=[pltpu.VMEM((n, 2), jnp.float32)],         # log-probs, all rows
        compiler_params=pltpu.CompilerParams(
            dimension_semantics=("parallel",),                    # shard graphs on v7x TCs
            vmem_limit_bytes=2 * 1024 * 1024,
        ),
    )(gi_flat, graph_data, param_slab)


# --------------------------- plain-JAX glue code ---------------------------- #
def build_normalized_adjacency(edge_index, num_nodes):
    """Dense D^{-1/2}(A+I)D^{-1/2} matching PyG gcn_norm (add_remaining_self_loops)."""
    src, dst = edge_index[0], edge_index[1]
    a = jnp.zeros((num_nodes, num_nodes), jnp.float32)
    a = a.at[dst, src].add(1.0)            # message flows src -> dst
    diag = jnp.diagonal(a)
    idx = jnp.arange(num_nodes)
    a = a.at[idx, idx].set(jnp.where(diag > 0, diag, 1.0))  # add only missing self-loops
    deg = jnp.sum(a, axis=1)               # in-degree incl. self-loop
    dinv = jax.lax.rsqrt(jnp.maximum(deg, 1e-12))
    return dinv[:, None] * a * dinv[None, :]


def init_params(key, in_channels, hidden_channels=32):
    k1, k2, k3 = jax.random.split(key, 3)
    scale1 = 1.0 / jnp.sqrt(in_channels)
    scale2 = 1.0 / jnp.sqrt(hidden_channels)
    return {
        "w1": jax.random.normal(k1, (in_channels, hidden_channels), jnp.float32) * scale1,
        "b1": jnp.zeros((1, hidden_channels), jnp.float32),
        "w2": jax.random.normal(k2, (hidden_channels, hidden_channels), jnp.float32) * scale2,
        "b2": jnp.zeros((1, hidden_channels), jnp.float32),
        "wfc": jax.random.normal(k3, (hidden_channels, 2), jnp.float32) * scale2,
        "bfc": jnp.zeros((1, 2), jnp.float32),
    }


def reference_forward(params, x, a_hat, game_indices):
    """Pure-JAX reference matching the PyTorch module (eval mode), one graph."""
    hid = jnp.maximum(a_hat @ (x @ params["w1"]) + params["b1"], 0.0)
    hid2 = jnp.maximum(a_hat @ (hid @ params["w2"]) + params["b2"], 0.0)
    logits = jnp.take(hid2, game_indices, axis=0) @ params["wfc"] + params["bfc"]
    return jax.nn.log_softmax(logits, axis=-1)


if __name__ == "__main__":
    key = jax.random.PRNGKey(0)
    k_p, k_rest = jax.random.split(key)

    # Small synthetic workload: 4 graphs x 16 nodes, 8 input features, hidden=32,
    # 4 game nodes per graph, 40 random edges per graph.
    num_graphs = 4
    num_nodes = 16
    in_channels = 8
    hidden_channels = 32
    num_games = 4
    num_edges = 40

    params = init_params(k_p, in_channels, hidden_channels)

    # One-time packing, OUTSIDE the jitted per-call path.
    slab = pack_params(params, in_channels, hidden_channels)

    xs, a_hats, gis, gdatas = [], [], [], []
    for kb in jax.random.split(k_rest, num_graphs):
        kx, ke, kg = jax.random.split(kb, 3)
        xb = jax.random.normal(kx, (num_nodes, in_channels), jnp.float32)
        eb = jax.random.randint(ke, (2, num_edges), 0, num_nodes, jnp.int32)
        gib = jax.random.randint(kg, (num_games,), 0, num_nodes, jnp.int32)
        ab = build_normalized_adjacency(eb, num_nodes)
        xs.append(xb)
        a_hats.append(ab)
        gis.append(gib)
        gdatas.append(pack_graph(ab, xb))          # once per graph, outside jit

    graph_data = jnp.stack(gdatas)                 # [B, N, N+C]
    game_indices = jnp.stack(gis)                  # [B, G]

    log_probs = simple_hockey_gnn(slab, graph_data, game_indices)
    jax.block_until_ready(log_probs)

    assert log_probs.shape == (num_graphs, num_games, 2)
    # log_softmax rows should exponentiate-sum to ~1.
    assert bool(jnp.allclose(jnp.sum(jnp.exp(log_probs), axis=-1), 1.0, atol=1e-5))
    # Match the pure-JAX reference of the PyTorch forward (eval mode), per graph.
    ref = jax.vmap(reference_forward, in_axes=(None, 0, 0, 0))(
        params, jnp.stack(xs), jnp.stack(a_hats), game_indices)
    assert bool(jnp.allclose(log_probs, ref, atol=1e-4, rtol=1e-4))
    print("KERNEL_OK")
</pallas_src>

<mosaic_0001>
module attributes {stable_mosaic.version = 11 : i64} {
  func.func @gnn_kernel(%arg0: i32, %arg1: memref<16xi32, #tpu.memory_space<smem>>, %arg2: memref<1x16x24xf32, #tpu.memory_space<vmem>>, %arg3: memref<96x32xf32, #tpu.memory_space<vmem>>, %arg4: memref<1x4x2xf32, #tpu.memory_space<vmem>>, %arg5: memref<16x2xf32, #tpu.memory_space<vmem>>) attributes {dimension_semantics = [#tpu.dimension_semantics<parallel>], iteration_bounds = array<i64: 4>, scalar_prefetch = 0 : i64, scratch_operands = 1 : i64, tpu.core_type = #tpu.core_type<tc>, window_params = [{transform_indices = @transform_0, window_bounds = array<i64: 16>}, {transform_indices = @transform_1, window_bounds = array<i64: 1, 16, 24>}, {pipeline_mode = #tpu.pipeline_mode<synchronous>, transform_indices = @transform_2, window_bounds = array<i64: 96, 32>}, {transform_indices = @transform_3, window_bounds = array<i64: 1, 4, 2>}]} {
    %c0 = arith.constant 0 : index
    %c0_0 = arith.constant 0 : index
    %c0_1 = arith.constant 0 : index
    %0 = vector.load %arg2[%c0, %c0_0, %c0_1] : memref<1x16x24xf32, #tpu.memory_space<vmem>>, vector<1x16x16xf32>
    %1 = vector.shape_cast %0 : vector<1x16x16xf32> to vector<16x16xf32>
    %c0_2 = arith.constant 0 : index
    %c0_3 = arith.constant 0 : index
    %c16 = arith.constant 16 : index
    %2 = vector.load %arg2[%c0_2, %c0_3, %c16] : memref<1x16x24xf32, #tpu.memory_space<vmem>>, vector<1x16x8xf32>
    %3 = vector.shape_cast %2 : vector<1x16x8xf32> to vector<16x8xf32>
    %c0_4 = arith.constant 0 : index
    %c0_5 = arith.constant 0 : index
    %4 = vector.load %arg3[%c0_4, %c0_5] : memref<96x32xf32, #tpu.memory_space<vmem>>, vector<8x32xf32>
    %c8 = arith.constant 8 : index
    %c0_6 = arith.constant 0 : index
    %5 = vector.load %arg3[%c8, %c0_6] : memref<96x32xf32, #tpu.memory_space<vmem>>, vector<1x32xf32>
    %c16_7 = arith.constant 16 : index
    %c0_8 = arith.constant 0 : index
    %6 = vector.load %arg3[%c16_7, %c0_8] : memref<96x32xf32, #tpu.memory_space<vmem>>, vector<32x32xf32>
    %c48 = arith.constant 48 : index
    %c0_9 = arith.constant 0 : index
    %7 = vector.load %arg3[%c48, %c0_9] : memref<96x32xf32, #tpu.memory_space<vmem>>, vector<1x32xf32>
    %c56 = arith.constant 56 : index
    %c0_10 = arith.constant 0 : index
    %8 = vector.load %arg3[%c56, %c0_10] : memref<96x32xf32, #tpu.memory_space<vmem>>, vector<32x32xf32>
    %c88 = arith.constant 88 : index
    %c0_11 = arith.constant 0 : index
    %9 = vector.load %arg3[%c88, %c0_11] : memref<96x32xf32, #tpu.memory_space<vmem>>, vector<1x32xf32>
    %cst = arith.constant dense<0.000000e+00> : vector<16x32xf32>
    %10 = tpu.matmul %3, %4, %cst {dimension_numbers = #tpu.dot_dimension_numbers<[1], [0], [0], [1], [0, 0, 1, 1], [], []>} : vector<16x8xf32>, vector<8x32xf32>, vector<16x32xf32> -> vector<16x32xf32>
    %cst_12 = arith.constant dense<0.000000e+00> : vector<16x32xf32>
    %11 = tpu.matmul %1, %10, %cst_12 {dimension_numbers = #tpu.dot_dimension_numbers<[1], [0], [0], [1], [0, 0, 1, 1], [], []>} : vector<16x16xf32>, vector<16x32xf32>, vector<16x32xf32> -> vector<16x32xf32>
    %12 = vector.broadcast %5 : vector<1x32xf32> to vector<16x32xf32>
    %13 = arith.addf %11, %12 : vector<16x32xf32>
    %cst_13 = arith.constant 0.000000e+00 : f32
    %14 = vector.broadcast %cst_13 : f32 to vector<16x32xf32>
    %15 = arith.maximumf %13, %14 : vector<16x32xf32>
    %cst_14 = arith.constant dense<0.000000e+00> : vector<16x32xf32>
    %16 = tpu.matmul %15, %6, %cst_14 {dimension_numbers = #tpu.dot_dimension_numbers<[1], [0], [0], [1], [0, 0, 1, 1], [], []>} : vector<16x32xf32>, vector<32x32xf32>, vector<16x32xf32> -> vector<16x32xf32>
    %cst_15 = arith.constant dense<0.000000e+00> : vector<16x32xf32>
    %17 = tpu.matmul %1, %16, %cst_15 {dimension_numbers = #tpu.dot_dimension_numbers<[1], [0], [0], [1], [0, 0, 1, 1], [], []>} : vector<16x16xf32>, vector<16x32xf32>, vector<16x32xf32> -> vector<16x32xf32>
    %18 = vector.broadcast %7 : vector<1x32xf32> to vector<16x32xf32>
    %19 = arith.addf %17, %18 : vector<16x32xf32>
    %cst_16 = arith.constant 0.000000e+00 : f32
    %20 = vector.broadcast %cst_16 : f32 to vector<16x32xf32>
    %21 = arith.maximumf %19, %20 : vector<16x32xf32>
    %cst_17 = arith.constant dense<0.000000e+00> : vector<16x32xf32>
    %22 = tpu.matmul %21, %8, %cst_17 {dimension_numbers = #tpu.dot_dimension_numbers<[1], [0], [0], [1], [0, 0, 1, 1], [], []>} : vector<16x32xf32>, vector<32x32xf32>, vector<16x32xf32> -> vector<16x32xf32>
    %23 = vector.broadcast %9 : vector<1x32xf32> to vector<16x32xf32>
    %24 = arith.addf %22, %23 : vector<16x32xf32>
    %25 = vector.extract_strided_slice %24 {offsets = [0, 0], sizes = [16, 1], strides = [1, 1]} : vector<16x32xf32> to vector<16x1xf32>
    %26 = vector.extract_strided_slice %24 {offsets = [0, 1], sizes = [16, 1], strides = [1, 1]} : vector<16x32xf32> to vector<16x1xf32>
    %27 = arith.maximumf %25, %26 : vector<16x1xf32>
    %28 = arith.subf %25, %27 : vector<16x1xf32>
    %29 = math.exp %28 : vector<16x1xf32>
    %30 = arith.subf %26, %27 : vector<16x1xf32>
    %31 = math.exp %30 : vector<16x1xf32>
    %32 = arith.addf %29, %31 : vector<16x1xf32>
    %33 = math.log %32 : vector<16x1xf32>
    %34 = arith.addf %27, %33 : vector<16x1xf32>
    %35 = vector.extract_strided_slice %24 {offsets = [0, 0], sizes = [16, 2], strides = [1, 1]} : vector<16x32xf32> to vector<16x2xf32>
    %36 = vector.broadcast %34 : vector<16x1xf32> to vector<16x2xf32>
    %37 = arith.subf %35, %36 : vector<16x2xf32>
    %c0_18 = arith.constant 0 : index
    %c0_19 = arith.constant 0 : index
    %38 = vector.load %arg5[%c0_18, %c0_19] : memref<16x2xf32, #tpu.memory_space<vmem>>, vector<16x2xf32>
    tpu.vector_store %arg5[%c0_18, %c0_19], %37 {strides = array<i32>} : memref<16x2xf32, #tpu.memory_space<vmem>>, vector<16x2xf32>,
    %c4_i32 = arith.constant 4 : i32
    %39 = arith.muli %arg0, %c4_i32 : i32
    %c0_i32 = arith.constant 0 : i32
    %40 = arith.addi %39, %c0_i32 : i32
    %41 = arith.index_cast %40 : i32 to index
    %42 = memref.load %arg1[%41] : memref<16xi32, #tpu.memory_space<smem>>
    %c0_i32_20 = arith.constant 0 : i32
    %43 = arith.maxsi %42, %c0_i32_20 : i32
    %c15_i32 = arith.constant 15 : i32
    %44 = arith.minsi %43, %c15_i32 : i32
    %45 = arith.index_cast %44 : i32 to index
    %c0_21 = arith.constant 0 : index
    %46 = vector.load %arg5[%45, %c0_21] : memref<16x2xf32, #tpu.memory_space<vmem>>, vector<1x2xf32>
    %c0_22 = arith.constant 0 : index
    %c0_23 = arith.constant 0 : index
    %c0_24 = arith.constant 0 : index
    %47 = vector.load %arg4[%c0_22, %c0_23, %c0_24] : memref<1x4x2xf32, #tpu.memory_space<vmem>>, vector<1x1x2xf32>
    %48 = vector.shape_cast %47 : vector<1x1x2xf32> to vector<1x2xf32>
    %49 = vector.shape_cast %46 : vector<1x2xf32> to vector<1x1x2xf32>
    tpu.vector_store %arg4[%c0_22, %c0_23, %c0_24], %49 {strides = array<i32>} : memref<1x4x2xf32, #tpu.memory_space<vmem>>, vector<1x1x2xf32>,
    %c4_i32_25 = arith.constant 4 : i32
    %50 = arith.muli %arg0, %c4_i32_25 : i32
    %c1_i32 = arith.constant 1 : i32
    %51 = arith.addi %50, %c1_i32 : i32
    %52 = arith.index_cast %51 : i32 to index
    %53 = memref.load %arg1[%52] : memref<16xi32, #tpu.memory_space<smem>>
    %c0_i32_26 = arith.constant 0 : i32
    %54 = arith.maxsi %53, %c0_i32_26 : i32
    %c15_i32_27 = arith.constant 15 : i32
    %55 = arith.minsi %54, %c15_i32_27 : i32
    %56 = arith.index_cast %55 : i32 to index
    %c0_28 = arith.constant 0 : index
    %57 = vector.load %arg5[%56, %c0_28] : memref<16x2xf32, #tpu.memory_space<vmem>>, vector<1x2xf32>
    %c0_29 = arith.constant 0 : index
    %c1 = arith.constant 1 : index
    %c0_30 = arith.constant 0 : index
    %58 = vector.load %arg4[%c0_29, %c1, %c0_30] : memref<1x4x2xf32, #tpu.memory_space<vmem>>, vector<1x1x2xf32>
    %59 = vector.shape_cast %58 : vector<1x1x2xf32> to vector<1x2xf32>
    %60 = vector.shape_cast %57 : vector<1x2xf32> to vector<1x1x2xf32>
    tpu.vector_store %arg4[%c0_29, %c1, %c0_30], %60 {strides = array<i32>} : memref<1x4x2xf32, #tpu.memory_space<vmem>>, vector<1x1x2xf32>,
    %c4_i32_31 = arith.constant 4 : i32
    %61 = arith.muli %arg0, %c4_i32_31 : i32
    %c2_i32 = arith.constant 2 : i32
    %62 = arith.addi %61, %c2_i32 : i32
    %63 = arith.index_cast %62 : i32 to index
    %64 = memref.load %arg1[%63] : memref<16xi32, #tpu.memory_space<smem>>
    %c0_i32_32 = arith.constant 0 : i32
    %65 = arith.maxsi %64, %c0_i32_32 : i32
    %c15_i32_33 = arith.constant 15 : i32
    %66 = arith.minsi %65, %c15_i32_33 : i32
    %67 = arith.index_cast %66 : i32 to index
    %c0_34 = arith.constant 0 : index
    %68 = vector.load %arg5[%67, %c0_34] : memref<16x2xf32, #tpu.memory_space<vmem>>, vector<1x2xf32>
    %c0_35 = arith.constant 0 : index
    %c2 = arith.constant 2 : index
    %c0_36 = arith.constant 0 : index
    %69 = vector.load %arg4[%c0_35, %c2, %c0_36] : memref<1x4x2xf32, #tpu.memory_space<vmem>>, vector<1x1x2xf32>
    %70 = vector.shape_cast %69 : vector<1x1x2xf32> to vector<1x2xf32>
    %71 = vector.shape_cast %68 : vector<1x2xf32> to vector<1x1x2xf32>
    tpu.vector_store %arg4[%c0_35, %c2, %c0_36], %71 {strides = array<i32>} : memref<1x4x2xf32, #tpu.memory_space<vmem>>, vector<1x1x2xf32>,
    %c4_i32_37 = arith.constant 4 : i32
    %72 = arith.muli %arg0, %c4_i32_37 : i32
    %c3_i32 = arith.constant 3 : i32
    %73 = arith.addi %72, %c3_i32 : i32
    %74 = arith.index_cast %73 : i32 to index
    %75 = memref.load %arg1[%74] : memref<16xi32, #tpu.memory_space<smem>>
    %c0_i32_38 = arith.constant 0 : i32
    %76 = arith.maxsi %75, %c0_i32_38 : i32
    %c15_i32_39 = arith.constant 15 : i32
    %77 = arith.minsi %76, %c15_i32_39 : i32
    %78 = arith.index_cast %77 : i32 to index
    %c0_40 = arith.constant 0 : index
    %79 = vector.load %arg5[%78, %c0_40] : memref<16x2xf32, #tpu.memory_space<vmem>>, vector<1x2xf32>
    %c0_41 = arith.constant 0 : index
    %c3 = arith.constant 3 : index
    %c0_42 = arith.constant 0 : index
    %80 = vector.load %arg4[%c0_41, %c3, %c0_42] : memref<1x4x2xf32, #tpu.memory_space<vmem>>, vector<1x1x2xf32>
    %81 = vector.shape_cast %80 : vector<1x1x2xf32> to vector<1x2xf32>
    %82 = vector.shape_cast %79 : vector<1x2xf32> to vector<1x1x2xf32>
    tpu.vector_store %arg4[%c0_41, %c3, %c0_42], %82 {strides = array<i32>} : memref<1x4x2xf32, #tpu.memory_space<vmem>>, vector<1x1x2xf32>,
    return
  }
  func.func @transform_0(%arg0: i32) -> i32 {
    %c0_i32 = arith.constant 0 : i32
    %c0_i32_0 = arith.constant 0 : i32
    return %c0_i32 : i32
  }
  func.func @transform_1(%arg0: i32) -> (i32, i32, i32) {
    %c0_i32 = arith.constant 0 : i32
    %c0_i32_0 = arith.constant 0 : i32
    %c0_i32_1 = arith.constant 0 : i32
    return %arg0, %c0_i32, %c0_i32_0 : i32, i32, i32
  }
  func.func @transform_2(%arg0: i32) -> (i32, i32) {
    %c0_i32 = arith.constant 0 : i32
    %c0_i32_0 = arith.constant 0 : i32
    %c0_i32_1 = arith.constant 0 : i32
    return %c0_i32, %c0_i32_0 : i32, i32
  }
  func.func @transform_3(%arg0: i32) -> (i32, i32, i32) {
    %c0_i32 = arith.constant 0 : i32
    %c0_i32_0 = arith.constant 0 : i32
    %c0_i32_1 = arith.constant 0 : i32
    return %arg0, %c0_i32, %c0_i32_0 : i32, i32, i32
  }
}

</mosaic_0001>

<llo_original>
// kernel: simple_hockey_gnn.1
$region0: #{simple_hockey_gnn.1}
  #allocation0 [shape = 'u32[]', space=smem, size = 0x4, offset = 0x4, fixed_abs, tag = 'smem constant byte address 0x4 - core index']
  #allocation1 [shape = 'u32[144,128]{1,0:T(1,128)}', space=vmem, size = 0x12000, scoped, tag = 'internal scratch']
  #allocation2 [shape = 'f32[16,2]{1,0:T(8,128)}', space=vmem, size = 0x2000, scoped, tag = 'scratch operand']
  %s0 = inlined_call_operand.vmem [shape: s32[16], index: 0, kind: input, shape index: {}]
  %s1 = inlined_call_operand.vmem [shape: f32[4,16,24], index: 1, kind: input, shape index: {}]
  %s2 = inlined_call_operand.vmem [shape: f32[96,32], index: 2, kind: input, shape index: {}]
  %s3 = inlined_call_operand.vmem [shape: f32[4,4,2], index: 3, kind: output, shape index: {}]
  %s4 = sld [smem:[#allocation0]]
  $region49: #{simple_hockey_gnn.1} parent=0
    _
  %s6 = ssub.s32 1, %s4
  %s7 = scalar_select 0, %s6, %s4
  $region1: #{simple_hockey_gnn.1} parent=0
    #allocation3 [shape = 'u8[512]{0}', space=smem, size = 0x200, scoped, tag = 'input window, operand 0, single buffered']
    #allocation4 [shape = 's32[2]{0}', space=sflag, size = 0x8, scoped, tag = 'scoped memory for simple_hockey_gnn.1']
    %8 = vsyncpa [#allocation4], 0
    loop: start=0, step=1, limit=6
    $region2: #{simple_hockey_gnn.1} parent=1 // loop_pre_header
      _
    $region3: #{simple_hockey_gnn.1} parent=1 // loop_header
      %s10 = sphi 0, %s14
      %p11 = scmp.ge.s32.totalorder %s10, 6
      %s18 = sphi 0, %s18
      %s20 = sphi 0, %s18
      %s21 = sphi 0, %s20
      %s35 = sphi 0, %s21
      %s41 = sphi 0, %s43
      %s44 = sphi 0, %s41
      %s45 = sphi 0, %s44
      %s61 = sphi 0, %s45
      %s65 = sphi 0, %s65
      %s67 = sphi 0, %s65
      %s68 = sphi 0, %s67
      %s82 = sphi 0, %s68
      %s88 = sphi 0, %s90
      %s91 = sphi 0, %s88
      %s92 = sphi 0, %s91
      %s108 = sphi 0, %s92
    $region4: #{simple_hockey_gnn.1} parent=1 // loop_header_branch
      %13 = sbr.rel (%p11) target = $region8
    $region5: #{simple_hockey_gnn.1} parent=1 // loop_body
      %s15 = ssub.s32 %s10, 1
      %s16 = ssub.s32 %s10, 2
      %s17 = sadd.s32 %s10, 1
      %s19 = sadd.s32 %s18, 1
      %p22 = scmp.eq.s32.totalorder %s10, 3
      %p23 = scmp.ne.s32.totalorder %s18, %s20
      %p24 = scmp.eq.s32.totalorder %s10, 0
      %p25 = por %p23, %p24
      %p26 = scmp.ne.s32.totalorder %s18, %s20
      %p27 = scmp.eq.s32.totalorder %s15, 3
      %p28 = por %p26, %p27
      %p29 = scmp.ne.s32.totalorder %s20, %s21
      %p30 = scmp.eq.s32.totalorder %s15, 0
      %p31 = por %p29, %p30
      %p32 = scmp.ne.s32.totalorder %s20, %s21
      %p33 = scmp.eq.s32.totalorder %s16, 3
      %p34 = por %p32, %p33
      %p36 = scmp.ne.s32.totalorder %s21, %s35
      %p37 = scmp.eq.s32.totalorder %s16, 0
      %p38 = por %p36, %p37
      %s39 = ssub.s32 %s10, %s17
      %p40 = scmp.eq.s32.totalorder %s39, 0
      %s42 = sadd.s32 %s41, 1
      %s43 = scalar_select %p40, %s41, %s42
      %p46 = pneg %p40
      %p47 = scmp.eq.s32.totalorder %s10, 3
      %p48 = por %p46, %p47
      %p49 = scmp.ne.s32.totalorder %s41, %s44
      %p50 = scmp.eq.s32.totalorder %s10, 0
      %p51 = por %p49, %p50
      %p52 = scmp.ne.s32.totalorder %s41, %s44
      %p53 = scmp.eq.s32.totalorder %s15, 3
      %p54 = por %p52, %p53
      %p55 = scmp.ne.s32.totalorder %s44, %s45
      %p56 = scmp.eq.s32.totalorder %s15, 0
      %p57 = por %p55, %p56
      %p58 = scmp.ne.s32.totalorder %s44, %s45
      %p59 = scmp.eq.s32.totalorder %s16, 3
      %p60 = por %p58, %p59
      %p62 = scmp.ne.s32.totalorder %s45, %s61
      %p63 = scmp.eq.s32.totalorder %s16, 0
      %p64 = por %p62, %p63
      %s66 = sadd.s32 %s65, 1
      %p69 = scmp.eq.s32.totalorder %s10, 3
      %p70 = scmp.ne.s32.totalorder %s65, %s67
      %p71 = scmp.eq.s32.totalorder %s10, 0
      %p72 = por %p70, %p71
      %p73 = scmp.ne.s32.totalorder %s65, %s67
      %p74 = scmp.eq.s32.totalorder %s15, 3
      %p75 = por %p73, %p74
      %p76 = scmp.ne.s32.totalorder %s67, %s68
      %p77 = scmp.eq.s32.totalorder %s15, 0
      %p78 = por %p76, %p77
      %p79 = scmp.ne.s32.totalorder %s67, %s68
      %p80 = scmp.eq.s32.totalorder %s16, 3
      %p81 = por %p79, %p80
      %p83 = scmp.ne.s32.totalorder %s68, %s82
      %p84 = scmp.eq.s32.totalorder %s16, 0
      %p85 = por %p83, %p84
      %s86 = ssub.s32 %s10, %s17
      %p87 = scmp.eq.s32.totalorder %s86, 0
      %s89 = sadd.s32 %s88, 1
      %s90 = scalar_select %p87, %s88, %s89
      %p93 = pneg %p87
      %p94 = scmp.eq.s32.totalorder %s10, 3
      %p95 = por %p93, %p94
      %p96 = scmp.ne.s32.totalorder %s88, %s91
      %p97 = scmp.eq.s32.totalorder %s10, 0
      %p98 = por %p96, %p97
      %p99 = scmp.ne.s32.totalorder %s88, %s91
      %p100 = scmp.eq.s32.totalorder %s15, 3
      %p101 = por %p99, %p100
      %p102 = scmp.ne.s32.totalorder %s91, %s92
      %p103 = scmp.eq.s32.totalorder %s15, 0
      %p104 = por %p102, %p103
      %p105 = scmp.ne.s32.totalorder %s91, %s92
      %p106 = scmp.eq.s32.totalorder %s16, 3
      %p107 = por %p105, %p106
      %p109 = scmp.ne.s32.totalorder %s92, %s108
      %p110 = scmp.eq.s32.totalorder %s16, 0
      %p111 = por %p109, %p110
      %p112 = scmp.le.s32.totalorder 1, %s10
      %p113 = scmp.lt.s32.totalorder %s10, 5
      %p114 = pnand %p112, %p113
      %p115 = pneg %p114
      // Predicated region
      $region9: #{simple_hockey_gnn.1} parent=5 // pred_check
        _
      $region10: #{simple_hockey_gnn.1} parent=5 // pred_check_branch
        %117 = sbr.rel (%p114) target = $region12
      $region11: #{simple_hockey_gnn.1} parent=5 // pred_region
        %s118 = ssub.s32 %s10, 1
        // Predicated region
        $region13: #{simple_hockey_gnn.1} parent=11 // pred_check
          %p119 = pneg %p31
        $region14: #{simple_hockey_gnn.1} parent=11 // pred_check_branch
          %121 = sbr.rel (%p119) target = $region16
        $region15: #{simple_hockey_gnn.1} parent=11 // pred_region
          %s123 = ssub.s32 16, 16
          %124 = vsyncadd [#allocation4], %s123
          %s126 = sshll.u32 %s0, 4
          %s127 = int_to_ptr.vmem [resolvable:$true] %s126
          %129 = dma.vmem_to_smem %s127, 16, [#allocation3], [#allocation4]
        $region16: #{simple_hockey_gnn.1} parent=11 // pred_fallthru
          _
        // Predicated region
        $region17: #{simple_hockey_gnn.1} parent=11 // pred_check
          %p130 = pneg %p78
        $region18: #{simple_hockey_gnn.1} parent=11 // pred_check_branch
          %132 = sbr.rel (%p130) target = $region20
        $region19: #{simple_hockey_gnn.1} parent=11 // pred_region
          _
        $region20: #{simple_hockey_gnn.1} parent=11 // pred_fallthru
          _
      $region12: #{simple_hockey_gnn.1} parent=5 // pred_fallthru
        _
      %p133 = scmp.lt.s32.totalorder %s10, 4
      // Predicated region
      $region21: #{simple_hockey_gnn.1} parent=5 // pred_check
        %p134 = pneg %p133
      $region22: #{simple_hockey_gnn.1} parent=5 // pred_check_branch
        %136 = sbr.rel (%p134) target = $region24
      $region23: #{simple_hockey_gnn.1} parent=5 // pred_region
        // Predicated region
        $region25: #{simple_hockey_gnn.1} parent=23 // pred_check
          %p137 = pneg %p51
        $region26: #{simple_hockey_gnn.1} parent=23 // pred_check_branch
          %139 = sbr.rel (%p137) target = $region28
        $region27: #{simple_hockey_gnn.1} parent=23 // pred_region
          %p140 = scmp.lt.s32.totalorder %s10, 3
          %s141 = scalar_select %p140, %s10, 3
          %s142 = smul.addr %s141, 2
          %s143 = smul.addr %s142, 8
          %s144 = scalar_lea.vmem %s1, %s143
        $region28: #{simple_hockey_gnn.1} parent=23 // pred_fallthru
          _
      $region24: #{simple_hockey_gnn.1} parent=5 // pred_fallthru
        _
      %p145 = scmp.le.s32.totalorder 1, %s10
      %p146 = scmp.lt.s32.totalorder %s10, 5
      %p147 = pnand %p145, %p146
      %p148 = pneg %p147
      // Predicated region
      $region29: #{simple_hockey_gnn.1} parent=5 // pred_check
        _
      $region30: #{simple_hockey_gnn.1} parent=5 // pred_check_branch
        %150 = sbr.rel (%p147) target = $region32
      $region31: #{simple_hockey_gnn.1} parent=5 // pred_region
        %s151 = ssub.s32 %s10, 1
        // Predicated region
        $region33: #{simple_hockey_gnn.1} parent=31 // pred_check
          %p152 = pneg %p31
        $region34: #{simple_hockey_gnn.1} parent=31 // pred_check_branch
          %154 = sbr.rel (%p152) target = $region36
        $region35: #{simple_hockey_gnn.1} parent=31 // pred_region
          %155 = dma.done [#allocation4], 16
        $region36: #{simple_hockey_gnn.1} parent=31 // pred_fallthru
          _
        %156 = sfence
        %p157 = pneg %p31
        %p158 = pneg %p28
        %p159 = scmp.lt.s32.totalorder %s15, 3
        %s160 = scalar_select %p159, %s15, 3
        %s161 = smul.addr %s160, 2
        %s162 = smul.addr %s161, 8
        %s163 = scalar_lea.vmem %s1, %s162
        %p164 = pneg %p57
        %p165 = pneg %p54
        %p166 = pneg %p78
        %p167 = pneg %p75
        %p168 = pneg %p104
        %p169 = pneg %p101
        %p170 = scmp.lt.s32.totalorder %s15, 3
        %s171 = scalar_select %p170, %s15, 3
        %s172 = smul.addr %s171, 4
        %s173 = scalar_lea.vmem %s3, %s172
        %p174 = scmp.lt.s32.totalorder %s15, 3
        %s175 = scalar_select %p174, %s15, 3
        %s176 = smul.addr %s175, 2
        %s177 = smul.addr %s176, 8
        %s178 = scalar_lea.vmem %s1, %s177
        %p179 = scmp.lt.s32.totalorder %s15, 3
        %s180 = scalar_select %p179, %s15, 3
        %s181 = smul.addr %s180, 4
        %s182 = scalar_lea.vmem %s3, %s181
        %v183 = vld [vmem:[%s178] sm:$0xff]
        %v184 = vld [vmem:[%s178 + $0x8] sm:$0xff]
        %v185 = vld [vmem:[%s2] sm:$0xff]
        %v186 = vld [vmem:[%s2 + $0x8] sm:$0x1]
        %v187 = vld [vmem:[%s2 + $0x10] sm:$0xff]
        %v188 = vld [vmem:[%s2 + $0x18] sm:$0xff]
        %v189 = vld [vmem:[%s2 + $0x20] sm:$0xff]
        %v190 = vld [vmem:[%s2 + $0x28] sm:$0xff]
        %v191 = vld [vmem:[%s2 + $0x30] sm:$0x1]
        %v192 = vld [vmem:[%s2 + $0x38] sm:$0xff]
        %v193 = vld [vmem:[%s2 + $0x40] sm:$0xff]
        %v194 = vld [vmem:[%s2 + $0x48] sm:$0xff]
        %v195 = vld [vmem:[%s2 + $0x50] sm:$0xff]
        %v196 = vld [vmem:[%s2 + $0x58] sm:$0x1]
        %199 = vrot.lane.b32.xlu0 %v183, 112
        %v200 = vpop.permute.xlu0 %199
        %201 = vrot.lane.b32.xlu0 %v184, 112
        %v202 = vpop.permute.xlu0 %201
        %vm203 = vcmask 64512
        %v204 = vsel %vm203, %v200, 0
        %v206 = vsel %vm203, %v202, 0
        %208 = vmatprep.subr.mxu0 0.0
        %209 = vmatpush1.msra.mxu0 0.0
        %210 = vmatprep.subr.mxu0 0.0
        %211 = vmatpush1.msra.mxu0 0.0
        %212 = vmatprep.subr.mxu0 0.0
        %213 = vmatpush1.msra.mxu0 0.0
        %214 = vmatprep.subr.mxu0 0.0
        %215 = vmatpush1.msra.mxu0 0.0
        %216 = vmatprep.subr.mxu0 0.0
        %217 = vmatpush1.msra.mxu0 0.0
        %218 = vmatprep.subr.mxu0 0.0
        %219 = vmatpush1.msra.mxu0 0.0
        %220 = vmatprep.subr.mxu0 0.0
        %221 = vmatpush1.msra.mxu0 0.0
        %222 = vmatprep.subr.mxu0 0.0
        %223 = vmatpush1.msra.mxu0 0.0
        %224 = vmatprep.subr.mxu0 0.0
        %225 = vmatpush1.msra.mxu0 0.0
        %226 = vmatprep.subr.mxu0 0.0
        %227 = vmatpush1.msra.mxu0 0.0
        %228 = vmatprep.subr.mxu0 0.0
        %229 = vmatpush1.msra.mxu0 0.0
        %230 = vmatprep.subr.mxu0 0.0
        %231 = vmatpush1.msra.mxu0 0.0
        %232 = vmatprep.subr.mxu0 0.0
        %233 = vmatpush1.msra.mxu0 0.0
        %234 = vmatprep.subr.mxu0 0.0
        %235 = vmatpush1.msra.mxu0 0.0
        %236 = vmatprep.subr.mxu0 0.0
        %237 = vmatpush1.msra.mxu0 0.0
        %238 = vmatprep.subr.mxu0 0.0
        %239 = vmatpush1.msra.mxu0 %v185
        %240 = vmatprep.subr.mxu0 0.0
        %241 = vmatpush2.msra.mxu0 0.0
        %242 = vmatprep.subr.mxu0 0.0
        %243 = vmatpush2.msra.mxu0 0.0
        %244 = vmatprep.subr.mxu0 0.0
        %245 = vmatpush2.msra.mxu0 0.0
        %246 = vmatprep.subr.mxu0 0.0
        %247 = vmatpush2.msra.mxu0 0.0
        %248 = vmatprep.subr.mxu0 0.0
        %249 = vmatpush2.msra.mxu0 0.0
        %250 = vmatprep.subr.mxu0 0.0
        %251 = vmatpush2.msra.mxu0 0.0
        %252 = vmatprep.subr.mxu0 0.0
        %253 = vmatpush2.msra.mxu0 0.0
        %254 = vmatprep.subr.mxu0 0.0
        %255 = vmatpush2.msra.mxu0 0.0
        %256 = vmatprep.subr.mxu0 0.0
        %257 = vmatpush2.msra.mxu0 0.0
        %258 = vmatprep.subr.mxu0 0.0
        %259 = vmatpush2.msra.mxu0 0.0
        %260 = vmatprep.subr.mxu0 0.0
        %261 = vmatpush2.msra.mxu0 0.0
        %262 = vmatprep.subr.mxu0 0.0
        %263 = vmatpush2.msra.mxu0 0.0
        %264 = vmatprep.subr.mxu0 0.0
        %265 = vmatpush2.msra.mxu0 0.0
        %266 = vmatprep.subr.mxu0 0.0
        %267 = vmatpush2.msra.mxu0 0.0
        %268 = vmatprep.subr.mxu0 0.0
        %269 = vmatpush2.msra.mxu0 0.0
        %270 = vmatprep.subr.mxu0 0.0
        %271 = vmatpush2.msra.mxu0 0.0
        %272 = vmatprep.mubr.f32.mxu0 0.0
        %273 = vmatmul.mubr.f32.gmra.mxu0 %v204
        %v274 = vpop.f32.mrf.mxu0
        %v275 = vadd.f32 0.0, %v274
        %v276 = vpop.f32.mrf.mxu0
        %277 = vmatprep.mubr.f32.mxu0 0.0
        %278 = vmatmul.mubr.f32.gmra.mxu0 %v206
        %v279 = vpop.f32.mrf.mxu0
        %v280 = vadd.f32 0.0, %v279
        %v281 = vpop.f32.mrf.mxu0
        %282 = vdwg.mxu0
        %v283 = vlaneseq
        %v284 = vshrl.u32 %v283, 7
        %v285 = vsub.s32 0, %v284
        %v286 = vrot.slane %v186, %v285
        %vm287 = vcmask 130048
        %v288 = vsel %vm287, %v183, 0
        %v290 = vsel %vm287, %v184, 0
        %292 = vmatprep.subr.mxu0 0.0
        %293 = vmatpush1.msra.mxu0 0.0
        %294 = vmatprep.subr.mxu0 0.0
        %295 = vmatpush1.msra.mxu0 0.0
        %296 = vmatprep.subr.mxu0 0.0
        %297 = vmatpush1.msra.mxu0 0.0
        %298 = vmatprep.subr.mxu0 0.0
        %299 = vmatpush1.msra.mxu0 0.0
        %300 = vmatprep.subr.mxu0 0.0
        %301 = vmatpush1.msra.mxu0 0.0
        %302 = vmatprep.subr.mxu0 0.0
        %303 = vmatpush1.msra.mxu0 0.0
        %304 = vmatprep.subr.mxu0 0.0
        %305 = vmatpush1.msra.mxu0 0.0
        %306 = vmatprep.subr.mxu0 0.0
        %307 = vmatpush1.msra.mxu0 0.0
        %308 = vmatprep.subr.mxu0 0.0
        %309 = vmatpush1.msra.mxu0 0.0
        %310 = vmatprep.subr.mxu0 0.0
        %311 = vmatpush1.msra.mxu0 0.0
        %312 = vmatprep.subr.mxu0 0.0
        %313 = vmatpush1.msra.mxu0 0.0
        %314 = vmatprep.subr.mxu0 0.0
        %315 = vmatpush1.msra.mxu0 0.0
        %316 = vmatprep.subr.mxu0 0.0
        %317 = vmatpush1.msra.mxu0 0.0
        %318 = vmatprep.subr.mxu0 0.0
        %319 = vmatpush1.msra.mxu0 0.0
        %320 = vmatprep.subr.mxu0 0.0
        %321 = vmatpush1.msra.mxu0 %v280
        %322 = vmatprep.subr.mxu0 0.0
        %323 = vmatpush1.msra.mxu0 %v275
        %324 = vmatprep.subr.mxu0 0.0
        %325 = vmatpush2.msra.mxu0 0.0
        %326 = vmatprep.subr.mxu0 0.0
        %327 = vmatpush2.msra.mxu0 0.0
        %328 = vmatprep.subr.mxu0 0.0
        %329 = vmatpush2.msra.mxu0 0.0
        %330 = vmatprep.subr.mxu0 0.0
        %331 = vmatpush2.msra.mxu0 0.0
        %332 = vmatprep.subr.mxu0 0.0
        %333 = vmatpush2.msra.mxu0 0.0
        %334 = vmatprep.subr.mxu0 0.0
        %335 = vmatpush2.msra.mxu0 0.0
        %336 = vmatprep.subr.mxu0 0.0
        %337 = vmatpush2.msra.mxu0 0.0
        %338 = vmatprep.subr.mxu0 0.0
        %339 = vmatpush2.msra.mxu0 0.0
        %340 = vmatprep.subr.mxu0 0.0
        %341 = vmatpush2.msra.mxu0 0.0
        %342 = vmatprep.subr.mxu0 0.0
        %343 = vmatpush2.msra.mxu0 0.0
        %344 = vmatprep.subr.mxu0 0.0
        %345 = vmatpush2.msra.mxu0 0.0
        %346 = vmatprep.subr.mxu0 0.0
        %347 = vmatpush2.msra.mxu0 0.0
        %348 = vmatprep.subr.mxu0 0.0
        %349 = vmatpush2.msra.mxu0 0.0
        %350 = vmatprep.subr.mxu0 0.0
        %351 = vmatpush2.msra.mxu0 0.0
        %352 = vmatprep.subr.mxu0 0.0
        %353 = vmatpush2.msra.mxu0 0.0
        %354 = vmatprep.subr.mxu0 0.0
        %355 = vmatpush2.msra.mxu0 0.0
        %356 = vmatprep.mubr.f32.mxu0 0.0
        %357 = vmatmul.mubr.f32.gmra.mxu0 %v288
        %v358 = vpop.f32.mrf.mxu0
        %v359 = vadd.f32 %v286, %v358
        %v360 = vpop.f32.mrf.mxu0
        %361 = vmatprep.mubr.f32.mxu0 0.0
        %362 = vmatmul.mubr.f32.gmra.mxu0 %v290
        %v363 = vpop.f32.mrf.mxu0
        %v364 = vadd.f32 %v286, %v363
        %v365 = vpop.f32.mrf.mxu0
        %366 = vdwg.mxu0
        %v367 = vmax.f32 %v359, 0.0
        %v368 = vmax.f32 %v364, 0.0
        %vm369 = vcmask 261120
        %v371 = vsel %vm369, %v367, 0
        %v374 = vsel %vm369, %v368, 0
        %376 = vmatprep.subr.mxu0 0.0
        %377 = vmatpush1.msra.mxu0 0.0
        %378 = vmatprep.subr.mxu0 0.0
        %379 = vmatpush1.msra.mxu0 0.0
        %380 = vmatprep.subr.mxu0 0.0
        %381 = vmatpush1.msra.mxu0 0.0
        %382 = vmatprep.subr.mxu0 0.0
        %383 = vmatpush1.msra.mxu0 0.0
        %384 = vmatprep.subr.mxu0 0.0
        %385 = vmatpush1.msra.mxu0 0.0
        %386 = vmatprep.subr.mxu0 0.0
        %387 = vmatpush1.msra.mxu0 0.0
        %388 = vmatprep.subr.mxu0 0.0
        %389 = vmatpush1.msra.mxu0 0.0
        %390 = vmatprep.subr.mxu0 0.0
        %391 = vmatpush1.msra.mxu0 0.0
        %392 = vmatprep.subr.mxu0 0.0
        %393 = vmatpush1.msra.mxu0 0.0
        %394 = vmatprep.subr.mxu0 0.0
        %395 = vmatpush1.msra.mxu0 0.0
        %396 = vmatprep.subr.mxu0 0.0
        %397 = vmatpush1.msra.mxu0 0.0
        %398 = vmatprep.subr.mxu0 0.0
        %399 = vmatpush1.msra.mxu0 0.0
        %400 = vmatprep.subr.mxu0 0.0
        %401 = vmatpush1.msra.mxu0 %v190
        %402 = vmatprep.subr.mxu0 0.0
        %403 = vmatpush1.msra.mxu0 %v189
        %404 = vmatprep.subr.mxu0 0.0
        %405 = vmatpush1.msra.mxu0 %v188
        %406 = vmatprep.subr.mxu0 0.0
        %407 = vmatpush1.msra.mxu0 %v187
        %408 = vmatprep.subr.mxu0 0.0
        %409 = vmatpush2.msra.mxu0 0.0
        %410 = vmatprep.subr.mxu0 0.0
        %411 = vmatpush2.msra.mxu0 0.0
        %412 = vmatprep.subr.mxu0 0.0
        %413 = vmatpush2.msra.mxu0 0.0
        %414 = vmatprep.subr.mxu0 0.0
        %415 = vmatpush2.msra.mxu0 0.0
        %416 = vmatprep.subr.mxu0 0.0
        %417 = vmatpush2.msra.mxu0 0.0
        %418 = vmatprep.subr.mxu0 0.0
        %419 = vmatpush2.msra.mxu0 0.0
        %420 = vmatprep.subr.mxu0 0.0
        %421 = vmatpush2.msra.mxu0 0.0
        %422 = vmatprep.subr.mxu0 0.0
        %423 = vmatpush2.msra.mxu0 0.0
        %424 = vmatprep.subr.mxu0 0.0
        %425 = vmatpush2.msra.mxu0 0.0
        %426 = vmatprep.subr.mxu0 0.0
        %427 = vmatpush2.msra.mxu0 0.0
        %428 = vmatprep.subr.mxu0 0.0
        %429 = vmatpush2.msra.mxu0 0.0
        %430 = vmatprep.subr.mxu0 0.0
        %431 = vmatpush2.msra.mxu0 0.0
        %432 = vmatprep.subr.mxu0 0.0
        %433 = vmatpush2.msra.mxu0 0.0
        %434 = vmatprep.subr.mxu0 0.0
        %435 = vmatpush2.msra.mxu0 0.0
        %436 = vmatprep.subr.mxu0 0.0
        %437 = vmatpush2.msra.mxu0 0.0
        %438 = vmatprep.subr.mxu0 0.0
        %439 = vmatpush2.msra.mxu0 0.0
        %440 = vmatprep.mubr.f32.mxu0 0.0
        %441 = vmatmul.mubr.f32.gmra.mxu0 %v371
        %v442 = vpop.f32.mrf.mxu0
        %v443 = vadd.f32 0.0, %v442
        %v444 = vpop.f32.mrf.mxu0
        %445 = vmatprep.mubr.f32.mxu0 0.0
        %446 = vmatmul.mubr.f32.gmra.mxu0 %v374
        %v447 = vpop.f32.mrf.mxu0
        %v448 = vadd.f32 0.0, %v447
        %v449 = vpop.f32.mrf.mxu0
        %450 = vdwg.mxu0
        %v451 = vlaneseq
        %v452 = vshrl.u32 %v451, 7
        %v453 = vsub.s32 0, %v452
        %v454 = vrot.slane %v191, %v453
        %455 = vmatprep.subr.mxu0 0.0
        %456 = vmatpush1.msra.mxu0 0.0
        %457 = vmatprep.subr.mxu0 0.0
        %458 = vmatpush1.msra.mxu0 0.0
        %459 = vmatprep.subr.mxu0 0.0
        %460 = vmatpush1.msra.mxu0 0.0
        %461 = vmatprep.subr.mxu0 0.0
        %462 = vmatpush1.msra.mxu0 0.0
        %463 = vmatprep.subr.mxu0 0.0
        %464 = vmatpush1.msra.mxu0 0.0
        %465 = vmatprep.subr.mxu0 0.0
        %466 = vmatpush1.msra.mxu0 0.0
        %467 = vmatprep.subr.mxu0 0.0
        %468 = vmatpush1.msra.mxu0 0.0
        %469 = vmatprep.subr.mxu0 0.0
        %470 = vmatpush1.msra.mxu0 0.0
        %471 = vmatprep.subr.mxu0 0.0
        %472 = vmatpush1.msra.mxu0 0.0
        %473 = vmatprep.subr.mxu0 0.0
        %474 = vmatpush1.msra.mxu0 0.0
        %475 = vmatprep.subr.mxu0 0.0
        %476 = vmatpush1.msra.mxu0 0.0
        %477 = vmatprep.subr.mxu0 0.0
        %478 = vmatpush1.msra.mxu0 0.0
        %479 = vmatprep.subr.mxu0 0.0
        %480 = vmatpush1.msra.mxu0 0.0
        %481 = vmatprep.subr.mxu0 0.0
        %482 = vmatpush1.msra.mxu0 0.0
        %483 = vmatprep.subr.mxu0 0.0
        %484 = vmatpush1.msra.mxu0 %v448
        %485 = vmatprep.subr.mxu0 0.0
        %486 = vmatpush1.msra.mxu0 %v443
        %487 = vmatprep.subr.mxu0 0.0
        %488 = vmatpush2.msra.mxu0 0.0
        %489 = vmatprep.subr.mxu0 0.0
        %490 = vmatpush2.msra.mxu0 0.0
        %491 = vmatprep.subr.mxu0 0.0
        %492 = vmatpush2.msra.mxu0 0.0
        %493 = vmatprep.subr.mxu0 0.0
        %494 = vmatpush2.msra.mxu0 0.0
        %495 = vmatprep.subr.mxu0 0.0
        %496 = vmatpush2.msra.mxu0 0.0
        %497 = vmatprep.subr.mxu0 0.0
        %498 = vmatpush2.msra.mxu0 0.0
        %499 = vmatprep.subr.mxu0 0.0
        %500 = vmatpush2.msra.mxu0 0.0
        %501 = vmatprep.subr.mxu0 0.0
        %502 = vmatpush2.msra.mxu0 0.0
        %503 = vmatprep.subr.mxu0 0.0
        %504 = vmatpush2.msra.mxu0 0.0
        %505 = vmatprep.subr.mxu0 0.0
        %506 = vmatpush2.msra.mxu0 0.0
        %507 = vmatprep.subr.mxu0 0.0
        %508 = vmatpush2.msra.mxu0 0.0
        %509 = vmatprep.subr.mxu0 0.0
        %510 = vmatpush2.msra.mxu0 0.0
        %511 = vmatprep.subr.mxu0 0.0
        %512 = vmatpush2.msra.mxu0 0.0
        %513 = vmatprep.subr.mxu0 0.0
        %514 = vmatpush2.msra.mxu0 0.0
        %515 = vmatprep.subr.mxu0 0.0
        %516 = vmatpush2.msra.mxu0 0.0
        %517 = vmatprep.subr.mxu0 0.0
        %518 = vmatpush2.msra.mxu0 0.0
        %519 = vmatprep.mubr.f32.mxu0 0.0
        %520 = vmatmul.mubr.f32.gmra.mxu0 %v288
        %v521 = vpop.f32.mrf.mxu0
        %v522 = vadd.f32 %v454, %v521
        %v523 = vpop.f32.mrf.mxu0
        %524 = vmatprep.mubr.f32.mxu0 0.0
        %525 = vmatmul.mubr.f32.gmra.mxu0 %v290
        %v526 = vpop.f32.mrf.mxu0
        %v527 = vadd.f32 %v454, %v526
        %v528 = vpop.f32.mrf.mxu0
        %529 = vdwg.mxu0
        %v530 = vmax.f32 %v522, 0.0
        %v531 = vmax.f32 %v527, 0.0
        %v532 = vlaneseq
        %v533 = vshrl.u32 %v532, 7
        %v534 = vsub.s32 0, %v533
        %v535 = vrot.slane %v196, %v534
        %v537 = vsel %vm369, %v530, 0
        %v540 = vsel %vm369, %v531, 0
        %542 = vmatprep.subr.mxu0 0.0
        %543 = vmatpush1.msra.mxu0 0.0
        %544 = vmatprep.subr.mxu0 0.0
        %545 = vmatpush1.msra.mxu0 0.0
        %546 = vmatprep.subr.mxu0 0.0
        %547 = vmatpush1.msra.mxu0 0.0
        %548 = vmatprep.subr.mxu0 0.0
        %549 = vmatpush1.msra.mxu0 0.0
        %550 = vmatprep.subr.mxu0 0.0
        %551 = vmatpush1.msra.mxu0 0.0
        %552 = vmatprep.subr.mxu0 0.0
        %553 = vmatpush1.msra.mxu0 0.0
        %554 = vmatprep.subr.mxu0 0.0
        %555 = vmatpush1.msra.mxu0 0.0
        %556 = vmatprep.subr.mxu0 0.0
        %557 = vmatpush1.msra.mxu0 0.0
        %558 = vmatprep.subr.mxu0 0.0
        %559 = vmatpush1.msra.mxu0 0.0
        %560 = vmatprep.subr.mxu0 0.0
        %561 = vmatpush1.msra.mxu0 0.0
        %562 = vmatprep.subr.mxu0 0.0
        %563 = vmatpush1.msra.mxu0 0.0
        %564 = vmatprep.subr.mxu0 0.0
        %565 = vmatpush1.msra.mxu0 0.0
        %566 = vmatprep.subr.mxu0 0.0
        %567 = vmatpush1.msra.mxu0 %v195
        %568 = vmatprep.subr.mxu0 0.0
        %569 = vmatpush1.msra.mxu0 %v194
        %570 = vmatprep.subr.mxu0 0.0
        %571 = vmatpush1.msra.mxu0 %v193
        %572 = vmatprep.subr.mxu0 0.0
        %573 = vmatpush1.msra.mxu0 %v192
        %574 = vmatprep.subr.mxu0 0.0
        %575 = vmatpush2.msra.mxu0 0.0
        %576 = vmatprep.subr.mxu0 0.0
        %577 = vmatpush2.msra.mxu0 0.0
        %578 = vmatprep.subr.mxu0 0.0
        %579 = vmatpush2.msra.mxu0 0.0
        %580 = vmatprep.subr.mxu0 0.0
        %581 = vmatpush2.msra.mxu0 0.0
        %582 = vmatprep.subr.mxu0 0.0
        %583 = vmatpush2.msra.mxu0 0.0
        %584 = vmatprep.subr.mxu0 0.0
        %585 = vmatpush2.msra.mxu0 0.0
        %586 = vmatprep.subr.mxu0 0.0
        %587 = vmatpush2.msra.mxu0 0.0
        %588 = vmatprep.subr.mxu0 0.0
        %589 = vmatpush2.msra.mxu0 0.0
        %590 = vmatprep.subr.mxu0 0.0
        %591 = vmatpush2.msra.mxu0 0.0
        %592 = vmatprep.subr.mxu0 0.0
        %593 = vmatpush2.msra.mxu0 0.0
        %594 = vmatprep.subr.mxu0 0.0
        %595 = vmatpush2.msra.mxu0 0.0
        %596 = vmatprep.subr.mxu0 0.0
        %597 = vmatpush2.msra.mxu0 0.0
        %598 = vmatprep.subr.mxu0 0.0
        %599 = vmatpush2.msra.mxu0 0.0
        %600 = vmatprep.subr.mxu0 0.0
        %601 = vmatpush2.msra.mxu0 0.0
        %602 = vmatprep.subr.mxu0 0.0
        %603 = vmatpush2.msra.mxu0 0.0
        %604 = vmatprep.subr.mxu0 0.0
        %605 = vmatpush2.msra.mxu0 0.0
        %606 = vmatprep.mubr.f32.mxu0 0.0
        %607 = vmatmul.mubr.f32.gmra.mxu0 %v537
        %v608 = vpop.f32.mrf.mxu0
        %v609 = vadd.f32 %v535, %v608
        %v610 = vpop.f32.mrf.mxu0
        %611 = vmatprep.mubr.f32.mxu0 0.0
        %612 = vmatmul.mubr.f32.gmra.mxu0 %v540
        %v613 = vpop.f32.mrf.mxu0
        %v614 = vadd.f32 %v535, %v613
        %v615 = vpop.f32.mrf.mxu0
        %616 = vdwg.mxu0
        %619 = vrot.lane.b32.xlu0 %v609, 127
        %v620 = vpop.permute.xlu0 %619
        %621 = vrot.lane.b32.xlu0 %v614, 127
        %v622 = vpop.permute.xlu0 %621
        %v625 = vmax.f32 %v609, %v620
        %v626 = vmax.f32 %v614, %v622
        %v627 = vsub.f32 %v609, %v625
        %v628 = vsub.f32 %v614, %v626
        %v629 = vmul.f32 %v627, 1.442695
        %v630 = vpow.pop %v629
        %v631 = vmul.f32 %v628, 1.442695
        %v632 = vpow.pop %v631
        %635 = vrot.lane.b32.xlu0 %v625, 1
        %v636 = vpop.permute.xlu0 %635
        %637 = vrot.lane.b32.xlu0 %v626, 1
        %v638 = vpop.permute.xlu0 %637
        %v641 = vsub.f32 %v609, %v636
        %v642 = vsub.f32 %v614, %v638
        %v643 = vmul.f32 %v641, 1.442695
        %v644 = vpow.pop %v643
        %v645 = vmul.f32 %v642, 1.442695
        %v646 = vpow.pop %v645
        %649 = vrot.lane.b32.xlu0 %v644, 127
        %v650 = vpop.permute.xlu0 %649
        %651 = vrot.lane.b32.xlu0 %v646, 127
        %v652 = vpop.permute.xlu0 %651
        %v655 = vadd.f32 %v630, %v650
        %v656 = vadd.f32 %v632, %v652
        %v657 = vlog2.pop %v655
        %v658 = vmul.f32 %v657, 0.6931472
        %v659 = vlog2.pop %v656
        %v660 = vmul.f32 %v659, 0.6931472
        %v661 = vadd.f32 %v625, %v658
        %v662 = vadd.f32 %v626, %v660
        %664 = vset.pattern.permute.xlu0 0
        %665 = vperm.xlu0 %664, %v661
        %v666 = vpop.permute.xlu0 %665
        %669 = vset.pattern.permute.xlu0 0
        %670 = vperm.xlu0 %669, %v662
        %v671 = vpop.permute.xlu0 %670
        %v673 = vsub.f32 %v609, %v666
        %v674 = vsub.f32 %v614, %v671
        %vm675 = vcmask 15360
        %676 = vst.msk [vmem:[#allocation2] sm:$0xff] %vm675, %v673
        %677 = vst.msk [vmem:[#allocation2 + $0x8] sm:$0xff] %vm675, %v674
        %s678 = smul.u32 %s15, 4
        %s679 = sld [smem:[#allocation3 + %s678]]
        %p680 = scmp.gt.s32.totalorder %s679, 0
        %s681 = scalar_select %p680, %s679, 0
        %p682 = scmp.lt.s32.totalorder %s681, 15
        %s683 = scalar_select %p682, %s681, 15
        %s684 = scalar_lea.vmem [#allocation2], %s683
        %v685 = vld [vmem:[%s684] sm:$0x1]
        %vm686 = vcmask 8192
        %687 = vst.msk [vmem:[%s182] sm:$0x1] %vm686, %v685
        %s688 = sadd.s32 %s678, 1
        %s689 = sld [smem:[#allocation3 + %s688]]
        %p690 = scmp.gt.s32.totalorder %s689, 0
        %s691 = scalar_select %p690, %s689, 0
        %p692 = scmp.lt.s32.totalorder %s691, 15
        %s693 = scalar_select %p692, %s691, 15
        %s694 = scalar_lea.vmem [#allocation2], %s693
        %v695 = vld [vmem:[%s694] sm:$0x1]
        %696 = vst.msk [vmem:[%s182 + $0x1] sm:$0x1] %vm686, %v695
        %s697 = sadd.s32 %s678, 2
        %s698 = sld [smem:[#allocation3 + %s697]]
        %p699 = scmp.gt.s32.totalorder %s698, 0
        %s700 = scalar_select %p699, %s698, 0
        %p701 = scmp.lt.s32.totalorder %s700, 15
        %s702 = scalar_select %p701, %s700, 15
        %s703 = scalar_lea.vmem [#allocation2], %s702
        %v704 = vld [vmem:[%s703] sm:$0x1]
        %705 = vst.msk [vmem:[%s182 + $0x2] sm:$0x1] %vm686, %v704
        %s706 = sadd.s32 %s678, 3
        %s707 = sld [smem:[#allocation3 + %s706]]
        %p708 = scmp.gt.s32.totalorder %s707, 0
        %s709 = scalar_select %p708, %s707, 0
        %p710 = scmp.lt.s32.totalorder %s709, 15
        %s711 = scalar_select %p710, %s709, 15
        %s712 = scalar_lea.vmem [#allocation2], %s711
        %v713 = vld [vmem:[%s712] sm:$0x1]
        %714 = vst.msk [vmem:[%s182 + $0x3] sm:$0x1] %vm686, %v713
        %p715 = scmp.lt.s32.totalorder %s15, 3
        %s716 = scalar_select %p715, %s15, 3
        %s717 = smul.addr %s716, 4
        %s718 = scalar_lea.vmem %s3, %s717
        // Predicated region
        $region37: #{simple_hockey_gnn.1} parent=31 // pred_check
          %p719 = pneg %p101
        $region38: #{simple_hockey_gnn.1} parent=31 // pred_check_branch
          %721 = sbr.rel (%p719) target = $region40
        $region39: #{simple_hockey_gnn.1} parent=31 // pred_region
          _
        $region40: #{simple_hockey_gnn.1} parent=31 // pred_fallthru
          _
      $region32: #{simple_hockey_gnn.1} parent=5 // pred_fallthru
        _
      %p722 = scmp.le.s32.totalorder 2, %s10
      // Predicated region
      $region41: #{simple_hockey_gnn.1} parent=5 // pred_check
        %p723 = pneg %p722
      $region42: #{simple_hockey_gnn.1} parent=5 // pred_check_branch
        %725 = sbr.rel (%p723) target = $region44
      $region43: #{simple_hockey_gnn.1} parent=5 // pred_region
        %s726 = ssub.s32 %s10, 2
        // Predicated region
        $region45: #{simple_hockey_gnn.1} parent=43 // pred_check
          %p727 = pneg %p107
        $region46: #{simple_hockey_gnn.1} parent=43 // pred_check_branch
          %729 = sbr.rel (%p727) target = $region48
        $region47: #{simple_hockey_gnn.1} parent=43 // pred_region
          %p730 = scmp.lt.s32.totalorder %s16, 3
          %s731 = scalar_select %p730, %s16, 3
          %s732 = smul.addr %s731, 4
          %s733 = scalar_lea.vmem %s3, %s732
        $region48: #{simple_hockey_gnn.1} parent=43 // pred_fallthru
          _
      $region44: #{simple_hockey_gnn.1} parent=5 // pred_fallthru
        _
    $region6: #{simple_hockey_gnn.1} parent=1 // loop_footer
      %s14 = sadd.s32 1, %s10
    $region7: #{simple_hockey_gnn.1} parent=1 // loop_footer_branch
      %9 = sbr.rel target = $region3
    $region8: #{simple_hockey_gnn.1} parent=1 // loop_exit
      _
    %734 = vsyncpa [#allocation4], 1
    %s735 = scalar_lea.sflag [#allocation4], 1
    %736 = vsyncpa %s735, 1

</llo_original>
